<compile_context>
chip_gen: v7x
topology: tpu7x:2x2x1
jax: 0.10.0
libtpu: 0.0.40
codegen_flags: <defaults>
</compile_context>

<pallas_src>
import functools

import jax
import jax.numpy as jnp
from jax.experimental import pallas as pl
from jax.experimental.pallas import tpu as pltpu


def _conv1x1_kernel(x_ref, w_ref, b_ref, o_ref, *, use_mxu, compute_dtype):
    # x_ref : (Nb, c_in, T)   folded-batch tile, T spatial lane positions
    # w_ref : (c_out, c_in)   resident weight
    # b_ref : (c_out, 1)      resident bias
    # o_ref : (Nb, c_out, T)
    x = x_ref[...]
    w = w_ref[...]
    b = b_ref[...]
    nb, c_in, T = x.shape
    c_out = w.shape[0]

    if use_mxu:
        if nb == 1:
            acc = jnp.dot(w, x[0], preferred_element_type=jnp.float32)
            acc = acc + b.astype(jnp.float32)
            o_ref[0] = acc.astype(o_ref.dtype)
        else:
            wb = jnp.broadcast_to(w[None], (nb, c_out, c_in))
            acc = jnp.einsum("noc,nct->not", wb, x,
                             preferred_element_type=jnp.float32)
            acc = acc + b.reshape(1, c_out, 1).astype(jnp.float32)
            o_ref[...] = acc.astype(o_ref.dtype)
    else:
        # Tiny-channel path: c_in broadcast multiply-adds on the VPU over a
        # lane-dense (Nb, c_out, T) tile; keeps the kernel on the memory path
        # and avoids MXU push/pop latency per tile.
        xc = x.astype(compute_dtype)
        wc = w.astype(compute_dtype)
        # Bias broadcast hoisted out of the unrolled loop.
        acc = jnp.broadcast_to(b.astype(compute_dtype).reshape(1, c_out, 1),
                               (nb, c_out, T))
        for ci in range(c_in):                       # static unroll (c_in < 16)
            acc = acc + wc[:, ci:ci + 1].reshape(1, c_out, 1) * xc[:, ci:ci + 1, :]
        o_ref[...] = acc.astype(o_ref.dtype)


def _vmem_capacity_bytes():
    try:
        info = pltpu.get_tpu_info()
        cap = getattr(info, "vmem_capacity_bytes", None)
        if cap:
            return int(cap)
    except Exception:
        pass
    return 64 * 1024 * 1024  # conservative default (v7x per-TC VMEM)


def _vpu_has_bf16():
    try:
        kind = jax.devices()[0].device_kind.lower()
    except Exception:
        return False
    # v5e VPU/EUP have no bf16; v6e/v7x do.
    return "v5" not in kind


@jax.jit
def linear_conv1x1(x_nchw, weight, bias):
    """x_nchw: (N, c_in, H, W); weight: (c_out, c_in, 1, 1); bias: (c_out,)."""
    N, c_in, H, W = x_nchw.shape
    c_out = weight.shape[0]
    HW = H * W

    # Free, contiguous reshape: NCHW -> (N, c_in, H*W).  No transpose, no pad.
    x_flat = x_nchw.reshape(N, c_in, HW)
    w_mat = weight.reshape(c_out, c_in)      # (c_out, c_in)
    b_mat = bias.reshape(c_out, 1)           # (c_out, 1)

    # MXU cutover at >=16 channels each way; below that the unrolled VPU FMA
    # path stays memory-bound, above it the MXU keeps it memory-bound.
    use_mxu = (c_in >= 16 and c_out >= 16)

    # bf16 multiply/accumulate where the VPU supports it (shallow accumulation
    # depth in this path since c_in < 16); f32 otherwise.
    if (not use_mxu) and x_nchw.dtype == jnp.bfloat16 and _vpu_has_bf16():
        compute_dtype = jnp.bfloat16
    else:
        compute_dtype = jnp.float32

    itemsize = jnp.dtype(x_nchw.dtype).itemsize
    w_itemsize = jnp.dtype(weight.dtype).itemsize
    acc_itemsize = 4 if use_mxu else jnp.dtype(compute_dtype).itemsize

    # --- VMEM-budget-aware spatial tile ------------------------------------
    # Per output lane we hold (double-buffered) c_in input rows + c_out output
    # rows, plus the in-flight accumulator.
    MAX_TILE = 65536                               # lanes; multiple of 128
    vmem_cap = _vmem_capacity_bytes()
    vmem_budget = vmem_cap // 4                    # leave plenty of headroom
    bytes_per_lane = 2 * (c_in + c_out) * itemsize + c_out * acc_itemsize
    cap = vmem_budget // max(bytes_per_lane, 1)
    cap = max(128, min(MAX_TILE, (cap // 128) * 128))

    # --- Grid: fold batch when HW is small; keep >=2 steps for v7x's 2 TCs --
    if HW <= cap:
        if N >= 2:
            Nb = max(1, min(N // 2, cap // max(HW, 1)))
            block_hw = HW                          # full dim -> always legal
            grid = (pl.cdiv(N, Nb), 1)
        else:
            Nb = 1
            if HW >= 256:
                # Split the hw axis in two so both v7x TensorCores get work.
                block_hw = min(HW, pl.cdiv(pl.cdiv(HW, 2), 128) * 128)
            else:
                block_hw = HW
            grid = (1, pl.cdiv(HW, block_hw))
    else:
        Nb = 1
        block_hw = cap                             # multiple of 128; ragged
        grid = (N, pl.cdiv(HW, block_hw))          # last block handled by Pallas

    # Scoped-VMEM hint: double-buffered tiles + intermediates, capped well
    # under physical VMEM.
    block_lanes = Nb * block_hw
    vmem_need = (2 * block_lanes * (c_in + c_out) * itemsize
                 + block_lanes * c_out * acc_itemsize
                 + 2 * (c_out * c_in + c_out) * w_itemsize)
    vmem_limit = int(min(max(2 * vmem_need, 32 * 1024 * 1024),
                         (vmem_cap * 3) // 4))

    kernel = functools.partial(_conv1x1_kernel, use_mxu=use_mxu,
                               compute_dtype=compute_dtype)

    cost = pl.CostEstimate(
        flops=2 * N * HW * c_in * c_out,
        transcendentals=0,
        bytes_accessed=(N * (c_in + c_out) * HW) * itemsize
        + (c_out * c_in + c_out) * w_itemsize,
    )

    out_flat = pl.pallas_call(
        kernel,
        out_shape=jax.ShapeDtypeStruct((N, c_out, HW), x_nchw.dtype),
        grid_spec=pltpu.PrefetchScalarGridSpec(
            num_scalar_prefetch=0,
            grid=grid,
            in_specs=[
                pl.BlockSpec((Nb, c_in, block_hw), lambda n, j: (n, 0, j)),
                pl.BlockSpec((c_out, c_in), lambda n, j: (0, 0)),
                pl.BlockSpec((c_out, 1), lambda n, j: (0, 0)),
            ],
            out_specs=pl.BlockSpec((Nb, c_out, block_hw), lambda n, j: (n, 0, j)),
        ),
        compiler_params=pltpu.CompilerParams(
            dimension_semantics=("parallel", "parallel"),
            vmem_limit_bytes=vmem_limit),
        cost_estimate=cost,
    )(x_flat, w_mat, b_mat)

    # Free reshape back to NCHW.
    return out_flat.reshape(N, c_out, H, W)


def _init_params(key, c_in, c_out, dtype=jnp.float32):
    # Deterministic init mimicking PyTorch Conv2d defaults
    # (kaiming-uniform-ish bounds; fan_in = c_in * 1 * 1).
    k_w, k_b = jax.random.split(key)
    bound = 1.0 / jnp.sqrt(jnp.asarray(c_in, dtype))
    weight = jax.random.uniform(k_w, (c_out, c_in, 1, 1), dtype, -bound, bound)
    bias = jax.random.uniform(k_b, (c_out,), dtype, -bound, bound)
    return weight, bias


if __name__ == "__main__":
    key = jax.random.PRNGKey(0)
    k_x, k_p = jax.random.split(key)

    N, c_in, c_out, H, W = 2, 4, 8, 16, 16
    x = jax.random.normal(k_x, (N, c_in, H, W), jnp.float32)
    weight, bias = _init_params(k_p, c_in, c_out)

    out = linear_conv1x1(x, weight, bias)
    out = jax.block_until_ready(out)

    # Reference check against plain-JAX 1x1 conv semantics.
    ref = jnp.einsum("nchw,oc->nohw", x, weight.reshape(c_out, c_in)) \
        + bias.reshape(1, c_out, 1, 1)
    assert out.shape == (N, c_out, H, W)
    assert jnp.allclose(out, ref, atol=1e-5, rtol=1e-5)

    print("KERNEL_OK")
</pallas_src>

<mosaic_0001>
module attributes {stable_mosaic.version = 11 : i64} {
  func.func @_conv1x1_kernel(%arg0: i32, %arg1: i32, %arg2: memref<1x4x256xf32, #tpu.memory_space<vmem>>, %arg3: memref<8x4xf32, #tpu.memory_space<vmem>>, %arg4: memref<8x1xf32, #tpu.memory_space<vmem>>, %arg5: memref<1x8x256xf32, #tpu.memory_space<vmem>>) attributes {dimension_semantics = [#tpu.dimension_semantics<parallel>, #tpu.dimension_semantics<parallel>], iteration_bounds = array<i64: 2, 1>, scalar_prefetch = 0 : i64, scratch_operands = 0 : i64, tpu.core_type = #tpu.core_type<tc>, window_params = [{transform_indices = @transform_0, window_bounds = array<i64: 1, 4, 256>}, {pipeline_mode = #tpu.pipeline_mode<synchronous>, transform_indices = @transform_1, window_bounds = array<i64: 8, 4>}, {pipeline_mode = #tpu.pipeline_mode<synchronous>, transform_indices = @transform_2, window_bounds = array<i64: 8, 1>}, {transform_indices = @transform_3, window_bounds = array<i64: 1, 8, 256>}]} {
    %c0 = arith.constant 0 : index
    %c0_0 = arith.constant 0 : index
    %c0_1 = arith.constant 0 : index
    %0 = vector.load %arg2[%c0, %c0_0, %c0_1] : memref<1x4x256xf32, #tpu.memory_space<vmem>>, vector<1x4x256xf32>
    %c0_2 = arith.constant 0 : index
    %c0_3 = arith.constant 0 : index
    %1 = vector.load %arg3[%c0_2, %c0_3] : memref<8x4xf32, #tpu.memory_space<vmem>>, vector<8x4xf32>
    %c0_4 = arith.constant 0 : index
    %c0_5 = arith.constant 0 : index
    %2 = vector.load %arg4[%c0_4, %c0_5] : memref<8x1xf32, #tpu.memory_space<vmem>>, vector<8x1xf32>
    %3 = vector.shape_cast %2 : vector<8x1xf32> to vector<1x8x1xf32>
    %4 = vector.shape_cast %3 : vector<1x8x1xf32> to vector<1x8x1xf32>
    %5 = vector.broadcast %4 : vector<1x8x1xf32> to vector<1x8x256xf32>
    %6 = vector.extract_strided_slice %1 {offsets = [0, 0], sizes = [8, 1], strides = [1, 1]} : vector<8x4xf32> to vector<8x1xf32>
    %7 = vector.shape_cast %6 : vector<8x1xf32> to vector<1x8x1xf32>
    %8 = vector.extract_strided_slice %0 {offsets = [0, 0, 0], sizes = [1, 1, 256], strides = [1, 1, 1]} : vector<1x4x256xf32> to vector<1x1x256xf32>
    %9 = vector.broadcast %7 : vector<1x8x1xf32> to vector<1x8x256xf32>
    %10 = vector.broadcast %8 : vector<1x1x256xf32> to vector<1x8x256xf32>
    %11 = arith.mulf %9, %10 : vector<1x8x256xf32>
    %12 = arith.addf %5, %11 : vector<1x8x256xf32>
    %13 = vector.extract_strided_slice %1 {offsets = [0, 1], sizes = [8, 1], strides = [1, 1]} : vector<8x4xf32> to vector<8x1xf32>
    %14 = vector.shape_cast %13 : vector<8x1xf32> to vector<1x8x1xf32>
    %15 = vector.extract_strided_slice %0 {offsets = [0, 1, 0], sizes = [1, 1, 256], strides = [1, 1, 1]} : vector<1x4x256xf32> to vector<1x1x256xf32>
    %16 = vector.broadcast %14 : vector<1x8x1xf32> to vector<1x8x256xf32>
    %17 = vector.broadcast %15 : vector<1x1x256xf32> to vector<1x8x256xf32>
    %18 = arith.mulf %16, %17 : vector<1x8x256xf32>
    %19 = arith.addf %12, %18 : vector<1x8x256xf32>
    %20 = vector.extract_strided_slice %1 {offsets = [0, 2], sizes = [8, 1], strides = [1, 1]} : vector<8x4xf32> to vector<8x1xf32>
    %21 = vector.shape_cast %20 : vector<8x1xf32> to vector<1x8x1xf32>
    %22 = vector.extract_strided_slice %0 {offsets = [0, 2, 0], sizes = [1, 1, 256], strides = [1, 1, 1]} : vector<1x4x256xf32> to vector<1x1x256xf32>
    %23 = vector.broadcast %21 : vector<1x8x1xf32> to vector<1x8x256xf32>
    %24 = vector.broadcast %22 : vector<1x1x256xf32> to vector<1x8x256xf32>
    %25 = arith.mulf %23, %24 : vector<1x8x256xf32>
    %26 = arith.addf %19, %25 : vector<1x8x256xf32>
    %27 = vector.extract_strided_slice %1 {offsets = [0, 3], sizes = [8, 1], strides = [1, 1]} : vector<8x4xf32> to vector<8x1xf32>
    %28 = vector.shape_cast %27 : vector<8x1xf32> to vector<1x8x1xf32>
    %29 = vector.extract_strided_slice %0 {offsets = [0, 3, 0], sizes = [1, 1, 256], strides = [1, 1, 1]} : vector<1x4x256xf32> to vector<1x1x256xf32>
    %30 = vector.broadcast %28 : vector<1x8x1xf32> to vector<1x8x256xf32>
    %31 = vector.broadcast %29 : vector<1x1x256xf32> to vector<1x8x256xf32>
    %32 = arith.mulf %30, %31 : vector<1x8x256xf32>
    %33 = arith.addf %26, %32 : vector<1x8x256xf32>
    %c0_6 = arith.constant 0 : index
    %c0_7 = arith.constant 0 : index
    %c0_8 = arith.constant 0 : index
    %34 = vector.load %arg5[%c0_6, %c0_7, %c0_8] : memref<1x8x256xf32, #tpu.memory_space<vmem>>, vector<1x8x256xf32>
    tpu.vector_store %arg5[%c0_6, %c0_7, %c0_8], %33 {strides = array<i32>} : memref<1x8x256xf32, #tpu.memory_space<vmem>>, vector<1x8x256xf32>,
    return
  }
  func.func @transform_0(%arg0: i32, %arg1: i32) -> (i32, i32, i32) {
    %c0_i32 = arith.constant 0 : i32
    %c0_i32_0 = arith.constant 0 : i32
    return %arg0, %c0_i32, %arg1 : i32, i32, i32
  }
  func.func @transform_1(%arg0: i32, %arg1: i32) -> (i32, i32) {
    %c0_i32 = arith.constant 0 : i32
    %c0_i32_0 = arith.constant 0 : i32
    %c0_i32_1 = arith.constant 0 : i32
    return %c0_i32, %c0_i32_0 : i32, i32
  }
  func.func @transform_2(%arg0: i32, %arg1: i32) -> (i32, i32) {
    %c0_i32 = arith.constant 0 : i32
    %c0_i32_0 = arith.constant 0 : i32
    %c0_i32_1 = arith.constant 0 : i32
    return %c0_i32, %c0_i32_0 : i32, i32
  }
  func.func @transform_3(%arg0: i32, %arg1: i32) -> (i32, i32, i32) {
    %c0_i32 = arith.constant 0 : i32
    %c0_i32_0 = arith.constant 0 : i32
    return %arg0, %c0_i32, %arg1 : i32, i32, i32
  }
}

</mosaic_0001>

<llo_original>
// kernel: linear_conv1x1.1
$region0: #{linear_conv1x1.1}
  #allocation0 [shape = 'u32[]', space=smem, size = 0x4, offset = 0x4, fixed_abs, tag = 'smem constant byte address 0x4 - core index']
  #allocation1 [shape = 'u32[144,128]{1,0:T(1,128)}', space=vmem, size = 0x12000, scoped, tag = 'internal scratch']
  %s0 = inlined_call_operand.vmem [shape: f32[2,4,256], index: 0, kind: input, shape index: {}]
  %s1 = inlined_call_operand.vmem [shape: f32[8,4], index: 1, kind: input, shape index: {}]
  %s2 = inlined_call_operand.vmem [shape: f32[8,1], index: 2, kind: input, shape index: {}]
  %s3 = inlined_call_operand.vmem [shape: f32[2,8,256], index: 3, kind: output, shape index: {}]
  %s4 = sld [smem:[#allocation0]]
  $region45: #{linear_conv1x1.1} parent=0
    _
  %s6 = ssub.s32 1, %s4
  %s7 = scalar_select 0, %s6, %s4
  loop: start=0, step=1, limit=4
  $region2: #{linear_conv1x1.1} parent=0 // loop_pre_header
    _
  $region3: #{linear_conv1x1.1} parent=0 // loop_header
    %s9 = sphi 0, %s13
    %p10 = scmp.ge.s32.totalorder %s9, 4
    %s16 = sphi 0, %s28
    %s17 = sphi 0, %s24
    %s18 = sphi 0, %s16
    %s19 = sphi 0, %s17
    %s20 = sphi 0, %s18
    %s21 = sphi 0, %s19
    %s33 = sphi 0, %s35
    %s36 = sphi 0, %s33
    %s37 = sphi 0, %s36
    %s53 = sphi 0, %s37
    %s57 = sphi 0, %s57
    %s59 = sphi 0, %s57
    %s60 = sphi 0, %s59
    %s74 = sphi 0, %s60
    %s78 = sphi 0, %s78
    %s80 = sphi 0, %s78
    %s81 = sphi 0, %s80
    %s95 = sphi 0, %s81
    %s103 = sphi 0, %s105
    %s106 = sphi 0, %s103
    %s107 = sphi 0, %s106
    %s123 = sphi 0, %s107
  $region4: #{linear_conv1x1.1} parent=0 // loop_header_branch
    %12 = sbr.rel (%p10) target = $region8
  $region5: #{linear_conv1x1.1} parent=0 // loop_body
    %s14 = ssub.s32 %s9, 1
    %s15 = ssub.s32 %s9, 2
    %s22 = sadd.s32 1, %s17
    %p23 = scmp.ge.s32.totalorder %s22, 1
    %s24 = scalar_select %p23, 0, %s22
    %s25 = sadd.s32 1, %s16
    %s26 = scalar_select %p23, %s25, %s16
    %p27 = scmp.ge.s32.totalorder %s26, 2
    %s28 = scalar_select %p27, 0, %s26
    %s29 = ssub.s32 %s16, %s28
    %s30 = ssub.s32 %s17, %s24
    %s31 = sor.u32 %s29, %s30
    %p32 = scmp.eq.s32.totalorder %s31, 0
    %s34 = sadd.s32 %s33, 1
    %s35 = scalar_select %p32, %s33, %s34
    %p38 = pneg %p32
    %p39 = scmp.eq.s32.totalorder %s9, 1
    %p40 = por %p38, %p39
    %p41 = scmp.ne.s32.totalorder %s33, %s36
    %p42 = scmp.eq.s32.totalorder %s9, 0
    %p43 = por %p41, %p42
    %p44 = scmp.ne.s32.totalorder %s33, %s36
    %p45 = scmp.eq.s32.totalorder %s14, 1
    %p46 = por %p44, %p45
    %p47 = scmp.ne.s32.totalorder %s36, %s37
    %p48 = scmp.eq.s32.totalorder %s14, 0
    %p49 = por %p47, %p48
    %p50 = scmp.ne.s32.totalorder %s36, %s37
    %p51 = scmp.eq.s32.totalorder %s15, 1
    %p52 = por %p50, %p51
    %p54 = scmp.ne.s32.totalorder %s37, %s53
    %p55 = scmp.eq.s32.totalorder %s15, 0
    %p56 = por %p54, %p55
    %s58 = sadd.s32 %s57, 1
    %p61 = scmp.eq.s32.totalorder %s9, 1
    %p62 = scmp.ne.s32.totalorder %s57, %s59
    %p63 = scmp.eq.s32.totalorder %s9, 0
    %p64 = por %p62, %p63
    %p65 = scmp.ne.s32.totalorder %s57, %s59
    %p66 = scmp.eq.s32.totalorder %s14, 1
    %p67 = por %p65, %p66
    %p68 = scmp.ne.s32.totalorder %s59, %s60
    %p69 = scmp.eq.s32.totalorder %s14, 0
    %p70 = por %p68, %p69
    %p71 = scmp.ne.s32.totalorder %s59, %s60
    %p72 = scmp.eq.s32.totalorder %s15, 1
    %p73 = por %p71, %p72
    %p75 = scmp.ne.s32.totalorder %s60, %s74
    %p76 = scmp.eq.s32.totalorder %s15, 0
    %p77 = por %p75, %p76
    %s79 = sadd.s32 %s78, 1
    %p82 = scmp.eq.s32.totalorder %s9, 1
    %p83 = scmp.ne.s32.totalorder %s78, %s80
    %p84 = scmp.eq.s32.totalorder %s9, 0
    %p85 = por %p83, %p84
    %p86 = scmp.ne.s32.totalorder %s78, %s80
    %p87 = scmp.eq.s32.totalorder %s14, 1
    %p88 = por %p86, %p87
    %p89 = scmp.ne.s32.totalorder %s80, %s81
    %p90 = scmp.eq.s32.totalorder %s14, 0
    %p91 = por %p89, %p90
    %p92 = scmp.ne.s32.totalorder %s80, %s81
    %p93 = scmp.eq.s32.totalorder %s15, 1
    %p94 = por %p92, %p93
    %p96 = scmp.ne.s32.totalorder %s81, %s95
    %p97 = scmp.eq.s32.totalorder %s15, 0
    %p98 = por %p96, %p97
    %s99 = ssub.s32 %s16, %s28
    %s100 = ssub.s32 %s17, %s24
    %s101 = sor.u32 %s99, %s100
    %p102 = scmp.eq.s32.totalorder %s101, 0
    %s104 = sadd.s32 %s103, 1
    %s105 = scalar_select %p102, %s103, %s104
    %p108 = pneg %p102
    %p109 = scmp.eq.s32.totalorder %s9, 1
    %p110 = por %p108, %p109
    %p111 = scmp.ne.s32.totalorder %s103, %s106
    %p112 = scmp.eq.s32.totalorder %s9, 0
    %p113 = por %p111, %p112
    %p114 = scmp.ne.s32.totalorder %s103, %s106
    %p115 = scmp.eq.s32.totalorder %s14, 1
    %p116 = por %p114, %p115
    %p117 = scmp.ne.s32.totalorder %s106, %s107
    %p118 = scmp.eq.s32.totalorder %s14, 0
    %p119 = por %p117, %p118
    %p120 = scmp.ne.s32.totalorder %s106, %s107
    %p121 = scmp.eq.s32.totalorder %s15, 1
    %p122 = por %p120, %p121
    %p124 = scmp.ne.s32.totalorder %s107, %s123
    %p125 = scmp.eq.s32.totalorder %s15, 0
    %p126 = por %p124, %p125
    %p127 = scmp.le.s32.totalorder 1, %s9
    %p128 = scmp.lt.s32.totalorder %s9, 3
    %p129 = pnand %p127, %p128
    %p130 = pneg %p129
    // Predicated region
    $region9: #{linear_conv1x1.1} parent=5 // pred_check
      _
    $region10: #{linear_conv1x1.1} parent=5 // pred_check_branch
      %132 = sbr.rel (%p129) target = $region12
    $region11: #{linear_conv1x1.1} parent=5 // pred_region
      %s133 = ssub.s32 %s9, 1
      // Predicated region
      $region13: #{linear_conv1x1.1} parent=11 // pred_check
        %p134 = pneg %p70
      $region14: #{linear_conv1x1.1} parent=11 // pred_check_branch
        %136 = sbr.rel (%p134) target = $region16
      $region15: #{linear_conv1x1.1} parent=11 // pred_region
        _
      $region16: #{linear_conv1x1.1} parent=11 // pred_fallthru
        _
      // Predicated region
      $region17: #{linear_conv1x1.1} parent=11 // pred_check
        %p137 = pneg %p91
      $region18: #{linear_conv1x1.1} parent=11 // pred_check_branch
        %139 = sbr.rel (%p137) target = $region20
      $region19: #{linear_conv1x1.1} parent=11 // pred_region
        _
      $region20: #{linear_conv1x1.1} parent=11 // pred_fallthru
        _
    $region12: #{linear_conv1x1.1} parent=5 // pred_fallthru
      _
    %p140 = scmp.lt.s32.totalorder %s9, 2
    // Predicated region
    $region21: #{linear_conv1x1.1} parent=5 // pred_check
      %p141 = pneg %p140
    $region22: #{linear_conv1x1.1} parent=5 // pred_check_branch
      %143 = sbr.rel (%p141) target = $region24
    $region23: #{linear_conv1x1.1} parent=5 // pred_region
      // Predicated region
      $region25: #{linear_conv1x1.1} parent=23 // pred_check
        %p144 = pneg %p43
      $region26: #{linear_conv1x1.1} parent=23 // pred_check_branch
        %146 = sbr.rel (%p144) target = $region28
      $region27: #{linear_conv1x1.1} parent=23 // pred_region
        %s147 = smul.u32 2, %s17
        %p148 = scmp.lt.s32.totalorder %s16, 1
        %s149 = scalar_select %p148, %s16, 1
        %p150 = scmp.lt.s32.totalorder %s147, 1
        %s151 = scalar_select %p150, %s147, 1
        %s152 = smul.addr %s149, 2
        %s153 = sadd.s32 %s151, %s152
        %s154 = smul.addr %s153, 4
        %s155 = scalar_lea.vmem %s0, %s154
        %s156 = smul.u32 2, %s17
      $region28: #{linear_conv1x1.1} parent=23 // pred_fallthru
        _
    $region24: #{linear_conv1x1.1} parent=5 // pred_fallthru
      _
    %p157 = scmp.le.s32.totalorder 1, %s9
    %p158 = scmp.lt.s32.totalorder %s9, 3
    %p159 = pnand %p157, %p158
    %p160 = pneg %p159
    // Predicated region
    $region29: #{linear_conv1x1.1} parent=5 // pred_check
      _
    $region30: #{linear_conv1x1.1} parent=5 // pred_check_branch
      %162 = sbr.rel (%p159) target = $region32
    $region31: #{linear_conv1x1.1} parent=5 // pred_region
      %s163 = ssub.s32 %s9, 1
      %s164 = smul.u32 2, %s19
      %p165 = scmp.lt.s32.totalorder %s18, 1
      %s166 = scalar_select %p165, %s18, 1
      %p167 = scmp.lt.s32.totalorder %s164, 1
      %s168 = scalar_select %p167, %s164, 1
      %s169 = smul.addr %s166, 2
      %s170 = sadd.s32 %s168, %s169
      %s171 = smul.addr %s170, 4
      %s172 = scalar_lea.vmem %s0, %s171
      %p173 = pneg %p49
      %p174 = pneg %p46
      %p175 = pneg %p70
      %p176 = pneg %p67
      %p177 = pneg %p91
      %p178 = pneg %p88
      %p179 = pneg %p119
      %p180 = pneg %p116
      %s181 = smul.u32 2, %s19
      %p182 = scmp.lt.s32.totalorder %s18, 1
      %s183 = scalar_select %p182, %s18, 1
      %p184 = scmp.lt.s32.totalorder %s181, 1
      %s185 = scalar_select %p184, %s181, 1
      %s186 = smul.addr %s183, 2
      %s187 = sadd.s32 %s185, %s186
      %s188 = smul.addr %s187, 8
      %s189 = scalar_lea.vmem %s3, %s188
      %s190 = smul.u32 2, %s19
      %p191 = scmp.lt.s32.totalorder %s18, 1
      %s192 = scalar_select %p191, %s18, 1
      %p193 = scmp.lt.s32.totalorder %s190, 1
      %s194 = scalar_select %p193, %s190, 1
      %s195 = smul.addr %s192, 2
      %s196 = sadd.s32 %s194, %s195
      %s197 = smul.addr %s196, 4
      %s198 = scalar_lea.vmem %s0, %s197
      %s199 = smul.u32 2, %s19
      %s200 = smul.u32 2, %s19
      %p201 = scmp.lt.s32.totalorder %s18, 1
      %s202 = scalar_select %p201, %s18, 1
      %p203 = scmp.lt.s32.totalorder %s200, 1
      %s204 = scalar_select %p203, %s200, 1
      %s205 = smul.addr %s202, 2
      %s206 = sadd.s32 %s204, %s205
      %s207 = smul.addr %s206, 8
      %s208 = scalar_lea.vmem %s3, %s207
      %s209 = smul.u32 2, %s19
      %v210 = vld [vmem:[%s198] sm:$0xff]
      %v211 = vld [vmem:[%s1] sm:$0xff]
      %v212 = vld [vmem:[%s2] sm:$0xff]
      %214 = vset.pattern.permute.xlu0 0
      %215 = vperm.xlu0 %214, %v212
      %v216 = vpop.permute.xlu0 %215
      %219 = vset.pattern.permute.xlu0 0
      %220 = vperm.xlu0 %219, %v211
      %v221 = vpop.permute.xlu0 %220
      %v224 = vlaneseq
      %v225 = vshrl.u32 %v224, 7
      %v226 = vsub.s32 0, %v225
      %v227 = vrot.slane %v210, %v226
      %v228 = vlaneseq
      %v229 = vshrl.u32 %v228, 7
      %v230 = vsub.s32 4, %v229
      %v231 = vrot.slane %v210, %v230
      %v234 = vlaneseq
      %v235 = vshrl.u32 %v234, 7
      %v236 = vsub.s32 0, %v235
      %v237 = vrot.slane %v227, %v236
      %v238 = vlaneseq
      %v239 = vshrl.u32 %v238, 7
      %v240 = vsub.s32 0, %v239
      %v241 = vrot.slane %v231, %v240
      %v242 = vmul.f32 %v221, %v237
      %v243 = vmul.f32 %v221, %v241
      %v244 = vadd.f32 %v216, %v242
      %v245 = vadd.f32 %v216, %v243
      %246 = vset.pattern.permute.xlu0 1
      %247 = vperm.xlu0 %246, %v211
      %v248 = vpop.permute.xlu0 %247
      %v250 = vlaneseq
      %v251 = vshrl.u32 %v250, 7
      %v252 = vsub.s32 1, %v251
      %v253 = vrot.slane %v210, %v252
      %v254 = vlaneseq
      %v255 = vshrl.u32 %v254, 7
      %v256 = vsub.s32 5, %v255
      %v257 = vrot.slane %v210, %v256
      %v260 = vlaneseq
      %v261 = vshrl.u32 %v260, 7
      %v262 = vsub.s32 1, %v261
      %v263 = vrot.slane %v253, %v262
      %v264 = vlaneseq
      %v265 = vshrl.u32 %v264, 7
      %v266 = vsub.s32 1, %v265
      %v267 = vrot.slane %v257, %v266
      %v268 = vmul.f32 %v248, %v263
      %v269 = vmul.f32 %v248, %v267
      %v270 = vadd.f32 %v244, %v268
      %v271 = vadd.f32 %v245, %v269
      %272 = vset.pattern.permute.xlu0 2
      %273 = vperm.xlu0 %272, %v211
      %v274 = vpop.permute.xlu0 %273
      %v276 = vlaneseq
      %v277 = vshrl.u32 %v276, 7
      %v278 = vsub.s32 2, %v277
      %v279 = vrot.slane %v210, %v278
      %v280 = vlaneseq
      %v281 = vshrl.u32 %v280, 7
      %v282 = vsub.s32 6, %v281
      %v283 = vrot.slane %v210, %v282
      %v286 = vlaneseq
      %v287 = vshrl.u32 %v286, 7
      %v288 = vsub.s32 2, %v287
      %v289 = vrot.slane %v279, %v288
      %v290 = vlaneseq
      %v291 = vshrl.u32 %v290, 7
      %v292 = vsub.s32 2, %v291
      %v293 = vrot.slane %v283, %v292
      %v294 = vmul.f32 %v274, %v289
      %v295 = vmul.f32 %v274, %v293
      %v296 = vadd.f32 %v270, %v294
      %v297 = vadd.f32 %v271, %v295
      %298 = vset.pattern.permute.xlu0 3
      %299 = vperm.xlu0 %298, %v211
      %v300 = vpop.permute.xlu0 %299
      %v302 = vlaneseq
      %v303 = vshrl.u32 %v302, 7
      %v304 = vsub.s32 3, %v303
      %v305 = vrot.slane %v210, %v304
      %v306 = vlaneseq
      %v307 = vshrl.u32 %v306, 7
      %v308 = vsub.s32 7, %v307
      %v309 = vrot.slane %v210, %v308
      %v312 = vlaneseq
      %v313 = vshrl.u32 %v312, 7
      %v314 = vsub.s32 3, %v313
      %v315 = vrot.slane %v305, %v314
      %v316 = vlaneseq
      %v317 = vshrl.u32 %v316, 7
      %v318 = vsub.s32 3, %v317
      %v319 = vrot.slane %v309, %v318
      %v320 = vmul.f32 %v300, %v315
      %v321 = vmul.f32 %v300, %v319
      %v322 = vadd.f32 %v296, %v320
      %v323 = vadd.f32 %v297, %v321
      %324 = vst [vmem:[%s208] sm:$0xff] %v322
      %325 = vst [vmem:[%s208 + $0x8] sm:$0xff] %v323
      %s326 = smul.u32 2, %s19
      %p327 = scmp.lt.s32.totalorder %s18, 1
      %s328 = scalar_select %p327, %s18, 1
      %p329 = scmp.lt.s32.totalorder %s326, 1
      %s330 = scalar_select %p329, %s326, 1
      %s331 = smul.addr %s328, 2
      %s332 = sadd.s32 %s330, %s331
      %s333 = smul.addr %s332, 8
      %s334 = scalar_lea.vmem %s3, %s333
      // Predicated region
      $region33: #{linear_conv1x1.1} parent=31 // pred_check
        %p335 = pneg %p116
      $region34: #{linear_conv1x1.1} parent=31 // pred_check_branch
        %337 = sbr.rel (%p335) target = $region36
      $region35: #{linear_conv1x1.1} parent=31 // pred_region
        %s338 = smul.u32 2, %s19
      $region36: #{linear_conv1x1.1} parent=31 // pred_fallthru
        _
    $region32: #{linear_conv1x1.1} parent=5 // pred_fallthru
      _
    %p339 = scmp.le.s32.totalorder 2, %s9
    // Predicated region
    $region37: #{linear_conv1x1.1} parent=5 // pred_check
      %p340 = pneg %p339
    $region38: #{linear_conv1x1.1} parent=5 // pred_check_branch
      %342 = sbr.rel (%p340) target = $region40
    $region39: #{linear_conv1x1.1} parent=5 // pred_region
      %s343 = ssub.s32 %s9, 2
      // Predicated region
      $region41: #{linear_conv1x1.1} parent=39 // pred_check
        %p344 = pneg %p122
      $region42: #{linear_conv1x1.1} parent=39 // pred_check_branch
        %346 = sbr.rel (%p344) target = $region44
      $region43: #{linear_conv1x1.1} parent=39 // pred_region
        %s347 = smul.u32 2, %s21
        %p348 = scmp.lt.s32.totalorder %s20, 1
        %s349 = scalar_select %p348, %s20, 1
        %p350 = scmp.lt.s32.totalorder %s347, 1
        %s351 = scalar_select %p350, %s347, 1
        %s352 = smul.addr %s349, 2
        %s353 = sadd.s32 %s351, %s352
        %s354 = smul.addr %s353, 8
        %s355 = scalar_lea.vmem %s3, %s354
      $region44: #{linear_conv1x1.1} parent=39 // pred_fallthru
        _
    $region40: #{linear_conv1x1.1} parent=5 // pred_fallthru
      _
  $region6: #{linear_conv1x1.1} parent=0 // loop_footer
    %s13 = sadd.s32 1, %s9
  $region7: #{linear_conv1x1.1} parent=0 // loop_footer_branch
    %8 = sbr.rel target = $region3
  $region8: #{linear_conv1x1.1} parent=0 // loop_exit
    _

</llo_original>
